<compile_context>
chip_gen: v7x
topology: tpu7x:2x2x1
jax: 0.10.0
libtpu: 0.0.40
codegen_flags: <defaults>
</compile_context>

<pallas_src>
import functools

import jax
import jax.numpy as jnp
from jax.experimental import pallas as pl
from jax.experimental.pallas import tpu as pltpu

INPUT_DIM = 128
HIDDEN1 = 128
HIDDEN2 = 64
OUTPUT_DIM = 11


def _round_up(x, m):
    return ((x + m - 1) // m) * m


def _mlp_kernel(x_ref, w1_ref, w2_ref, w3_ref, b1_ref, b2_ref, b3_ref, o_ref,
                *, compute_dtype):
    cd = compute_dtype
    # Weights / biases use constant index_maps -> resident in VMEM across grid.
    w1 = w1_ref[...].astype(cd)          # (128, 128)
    w2 = w2_ref[...].astype(cd)          # (128, 64)
    w3 = w3_ref[...].astype(cd)          # (64, 11)
    b1 = b1_ref[...]                     # (1, 128) f32
    b2 = b2_ref[...]                     # (1, 64)  f32
    b3 = b3_ref[...]                     # (1, 11)  f32

    x = x_ref[...].astype(cd)            # (bb, 128)
    h1 = jnp.maximum(
        jnp.dot(x, w1, preferred_element_type=jnp.float32) + b1, 0.0)
    h2 = jnp.maximum(
        jnp.dot(h1.astype(cd), w2, preferred_element_type=jnp.float32) + b2, 0.0)
    out = jnp.dot(h2.astype(cd), w3, preferred_element_type=jnp.float32) + b3
    o_ref[...] = out.astype(o_ref.dtype)


@functools.partial(jax.jit, static_argnames=("block_b", "use_bf16_matmul"))
def multilabel_mlp_forward(x, params, *, block_b=1024, use_bf16_matmul=False):
    """x: (B, INPUT_DIM) float32. Returns (B, OUTPUT_DIM) float32 logits."""
    w1, b1, w2, b2, w3, b3 = params
    B = x.shape[0]

    # Batch tile: clamp to the (sublane-rounded) batch; for large single-tile
    # batches force >= 2 grid steps so both v7x TensorCores get work.
    bb = min(block_b, _round_up(B, 8))
    if B >= 1024 and pl.cdiv(B, bb) < 2:
        bb = _round_up(pl.cdiv(B, 2), 128)
    grid = (pl.cdiv(B, bb),)

    compute_dtype = jnp.bfloat16 if use_bf16_matmul else jnp.float32
    kern = functools.partial(_mlp_kernel, compute_dtype=compute_dtype)

    return pl.pallas_call(
        kern,
        out_shape=jax.ShapeDtypeStruct((B, OUTPUT_DIM), jnp.float32),
        grid_spec=pltpu.PrefetchScalarGridSpec(
            num_scalar_prefetch=0,
            grid=grid,
            in_specs=[
                pl.BlockSpec((bb, INPUT_DIM), lambda i: (i, 0)),        # x (ragged last tile OK)
                pl.BlockSpec((INPUT_DIM, HIDDEN1), lambda i: (0, 0)),   # w1
                pl.BlockSpec((HIDDEN1, HIDDEN2), lambda i: (0, 0)),     # w2
                pl.BlockSpec((HIDDEN2, OUTPUT_DIM), lambda i: (0, 0)),  # w3
                pl.BlockSpec((1, HIDDEN1), lambda i: (0, 0)),           # b1
                pl.BlockSpec((1, HIDDEN2), lambda i: (0, 0)),           # b2
                pl.BlockSpec((1, OUTPUT_DIM), lambda i: (0, 0)),        # b3
            ],
            out_specs=pl.BlockSpec((bb, OUTPUT_DIM), lambda i: (i, 0)),
        ),
        compiler_params=pltpu.CompilerParams(
            dimension_semantics=("parallel",),
        ),
    )(x, w1, w2, w3, b1, b2, b3)


def init_params(key):
    """Deterministic init mimicking nn.Linear (uniform +-1/sqrt(fan_in))."""
    def linear(key, fan_in, fan_out):
        kw, kb = jax.random.split(key)
        bound = 1.0 / jnp.sqrt(fan_in)
        # Stored as (in, out) — transpose of PyTorch's (out, in), so the kernel
        # computes x @ W + b, identical to PyTorch's x @ W.T + b.
        w = jax.random.uniform(kw, (fan_in, fan_out), jnp.float32, -bound, bound)
        b = jax.random.uniform(kb, (1, fan_out), jnp.float32, -bound, bound)
        return w, b

    k1, k2, k3 = jax.random.split(key, 3)
    w1, b1 = linear(k1, INPUT_DIM, HIDDEN1)
    w2, b2 = linear(k2, HIDDEN1, HIDDEN2)
    w3, b3 = linear(k3, HIDDEN2, OUTPUT_DIM)
    return (w1, b1, w2, b2, w3, b3)


def reference_forward(x, params):
    w1, b1, w2, b2, w3, b3 = params
    h1 = jnp.maximum(x @ w1 + b1, 0.0)
    h2 = jnp.maximum(h1 @ w2 + b2, 0.0)
    return h2 @ w3 + b3


if __name__ == "__main__":
    key = jax.random.PRNGKey(0)
    kx, kp = jax.random.split(key)

    batch = 37  # small, non-multiple-of-8 batch -> exercises the ragged last block
    x = jax.random.normal(kx, (batch, INPUT_DIM), dtype=jnp.float32)
    params = init_params(kp)

    out = multilabel_mlp_forward(x, params)
    out = jax.block_until_ready(out)

    ref = reference_forward(x, params)
    assert out.shape == (batch, OUTPUT_DIM), out.shape
    assert jnp.allclose(out, ref, atol=1e-4, rtol=1e-4), "mismatch vs reference"

    print("KERNEL_OK")
</pallas_src>

<mosaic_0001>
module attributes {stable_mosaic.version = 11 : i64} {
  func.func @_mlp_kernel(%arg0: i32, %arg1: memref<40x128xf32, #tpu.memory_space<vmem>>, %arg2: memref<128x128xf32, #tpu.memory_space<vmem>>, %arg3: memref<128x64xf32, #tpu.memory_space<vmem>>, %arg4: memref<64x11xf32, #tpu.memory_space<vmem>>, %arg5: memref<1x128xf32, #tpu.memory_space<vmem>>, %arg6: memref<1x64xf32, #tpu.memory_space<vmem>>, %arg7: memref<1x11xf32, #tpu.memory_space<vmem>>, %arg8: memref<40x11xf32, #tpu.memory_space<vmem>>) attributes {dimension_semantics = [#tpu.dimension_semantics<parallel>], iteration_bounds = array<i64: 1>, scalar_prefetch = 0 : i64, scratch_operands = 0 : i64, tpu.core_type = #tpu.core_type<tc>, window_params = [{transform_indices = @transform_0, window_bounds = array<i64: 40, 128>}, {pipeline_mode = #tpu.pipeline_mode<synchronous>, transform_indices = @transform_1, window_bounds = array<i64: 128, 128>}, {pipeline_mode = #tpu.pipeline_mode<synchronous>, transform_indices = @transform_2, window_bounds = array<i64: 128, 64>}, {pipeline_mode = #tpu.pipeline_mode<synchronous>, transform_indices = @transform_3, window_bounds = array<i64: 64, 11>}, {pipeline_mode = #tpu.pipeline_mode<synchronous>, transform_indices = @transform_4, window_bounds = array<i64: 1, 128>}, {pipeline_mode = #tpu.pipeline_mode<synchronous>, transform_indices = @transform_5, window_bounds = array<i64: 1, 64>}, {pipeline_mode = #tpu.pipeline_mode<synchronous>, transform_indices = @transform_6, window_bounds = array<i64: 1, 11>}, {transform_indices = @transform_7, window_bounds = array<i64: 40, 11>}]} {
    %c0 = arith.constant 0 : index
    %c0_0 = arith.constant 0 : index
    %0 = vector.load %arg2[%c0, %c0_0] : memref<128x128xf32, #tpu.memory_space<vmem>>, vector<128x128xf32>
    %c0_1 = arith.constant 0 : index
    %c0_2 = arith.constant 0 : index
    %1 = vector.load %arg3[%c0_1, %c0_2] : memref<128x64xf32, #tpu.memory_space<vmem>>, vector<128x64xf32>
    %c0_3 = arith.constant 0 : index
    %c0_4 = arith.constant 0 : index
    %2 = vector.load %arg4[%c0_3, %c0_4] : memref<64x11xf32, #tpu.memory_space<vmem>>, vector<64x11xf32>
    %c0_5 = arith.constant 0 : index
    %c0_6 = arith.constant 0 : index
    %3 = vector.load %arg5[%c0_5, %c0_6] : memref<1x128xf32, #tpu.memory_space<vmem>>, vector<1x128xf32>
    %c0_7 = arith.constant 0 : index
    %c0_8 = arith.constant 0 : index
    %4 = vector.load %arg6[%c0_7, %c0_8] : memref<1x64xf32, #tpu.memory_space<vmem>>, vector<1x64xf32>
    %c0_9 = arith.constant 0 : index
    %c0_10 = arith.constant 0 : index
    %5 = vector.load %arg7[%c0_9, %c0_10] : memref<1x11xf32, #tpu.memory_space<vmem>>, vector<1x11xf32>
    %c0_11 = arith.constant 0 : index
    %c0_12 = arith.constant 0 : index
    %6 = vector.load %arg1[%c0_11, %c0_12] : memref<40x128xf32, #tpu.memory_space<vmem>>, vector<40x128xf32>
    %cst = arith.constant dense<0.000000e+00> : vector<40x128xf32>
    %7 = tpu.matmul %6, %0, %cst {dimension_numbers = #tpu.dot_dimension_numbers<[1], [0], [0], [1], [0, 0, 1, 1], [], []>} : vector<40x128xf32>, vector<128x128xf32>, vector<40x128xf32> -> vector<40x128xf32>
    %8 = vector.broadcast %3 : vector<1x128xf32> to vector<40x128xf32>
    %9 = arith.addf %7, %8 : vector<40x128xf32>
    %cst_13 = arith.constant 0.000000e+00 : f32
    %10 = vector.broadcast %cst_13 : f32 to vector<40x128xf32>
    %11 = arith.maximumf %9, %10 : vector<40x128xf32>
    %cst_14 = arith.constant dense<0.000000e+00> : vector<40x64xf32>
    %12 = tpu.matmul %11, %1, %cst_14 {dimension_numbers = #tpu.dot_dimension_numbers<[1], [0], [0], [1], [0, 0, 1, 1], [], []>} : vector<40x128xf32>, vector<128x64xf32>, vector<40x64xf32> -> vector<40x64xf32>
    %13 = vector.broadcast %4 : vector<1x64xf32> to vector<40x64xf32>
    %14 = arith.addf %12, %13 : vector<40x64xf32>
    %cst_15 = arith.constant 0.000000e+00 : f32
    %15 = vector.broadcast %cst_15 : f32 to vector<40x64xf32>
    %16 = arith.maximumf %14, %15 : vector<40x64xf32>
    %cst_16 = arith.constant dense<0.000000e+00> : vector<40x11xf32>
    %17 = tpu.matmul %16, %2, %cst_16 {dimension_numbers = #tpu.dot_dimension_numbers<[1], [0], [0], [1], [0, 0, 1, 1], [], []>} : vector<40x64xf32>, vector<64x11xf32>, vector<40x11xf32> -> vector<40x11xf32>
    %18 = vector.broadcast %5 : vector<1x11xf32> to vector<40x11xf32>
    %19 = arith.addf %17, %18 : vector<40x11xf32>
    %c0_17 = arith.constant 0 : index
    %c0_18 = arith.constant 0 : index
    %20 = vector.load %arg8[%c0_17, %c0_18] : memref<40x11xf32, #tpu.memory_space<vmem>>, vector<40x11xf32>
    tpu.vector_store %arg8[%c0_17, %c0_18], %19 {strides = array<i32>} : memref<40x11xf32, #tpu.memory_space<vmem>>, vector<40x11xf32>,
    return
  }
  func.func @transform_0(%arg0: i32) -> (i32, i32) {
    %c0_i32 = arith.constant 0 : i32
    %c0_i32_0 = arith.constant 0 : i32
    return %arg0, %c0_i32 : i32, i32
  }
  func.func @transform_1(%arg0: i32) -> (i32, i32) {
    %c0_i32 = arith.constant 0 : i32
    %c0_i32_0 = arith.constant 0 : i32
    %c0_i32_1 = arith.constant 0 : i32
    return %c0_i32, %c0_i32_0 : i32, i32
  }
  func.func @transform_2(%arg0: i32) -> (i32, i32) {
    %c0_i32 = arith.constant 0 : i32
    %c0_i32_0 = arith.constant 0 : i32
    %c0_i32_1 = arith.constant 0 : i32
    return %c0_i32, %c0_i32_0 : i32, i32
  }
  func.func @transform_3(%arg0: i32) -> (i32, i32) {
    %c0_i32 = arith.constant 0 : i32
    %c0_i32_0 = arith.constant 0 : i32
    %c0_i32_1 = arith.constant 0 : i32
    return %c0_i32, %c0_i32_0 : i32, i32
  }
  func.func @transform_4(%arg0: i32) -> (i32, i32) {
    %c0_i32 = arith.constant 0 : i32
    %c0_i32_0 = arith.constant 0 : i32
    %c0_i32_1 = arith.constant 0 : i32
    return %c0_i32, %c0_i32_0 : i32, i32
  }
  func.func @transform_5(%arg0: i32) -> (i32, i32) {
    %c0_i32 = arith.constant 0 : i32
    %c0_i32_0 = arith.constant 0 : i32
    %c0_i32_1 = arith.constant 0 : i32
    return %c0_i32, %c0_i32_0 : i32, i32
  }
  func.func @transform_6(%arg0: i32) -> (i32, i32) {
    %c0_i32 = arith.constant 0 : i32
    %c0_i32_0 = arith.constant 0 : i32
    %c0_i32_1 = arith.constant 0 : i32
    return %c0_i32, %c0_i32_0 : i32, i32
  }
  func.func @transform_7(%arg0: i32) -> (i32, i32) {
    %c0_i32 = arith.constant 0 : i32
    %c0_i32_0 = arith.constant 0 : i32
    return %arg0, %c0_i32 : i32, i32
  }
}

</mosaic_0001>

<llo_original>
// kernel: multilabel_mlp_forward.1
$region0: #{multilabel_mlp_forward.1}
  #allocation0 [shape = 'u32[]', space=smem, size = 0x4, offset = 0x4, fixed_abs, tag = 'smem constant byte address 0x4 - core index']
  #allocation1 [shape = 'u32[144,128]{1,0:T(1,128)}', space=vmem, size = 0x12000, scoped, tag = 'internal scratch']
  %s0 = inlined_call_operand.vmem [shape: f32[37,128], index: 0, kind: input, shape index: {}]
  %s1 = inlined_call_operand.vmem [shape: f32[128,128], index: 1, kind: input, shape index: {}]
  %s2 = inlined_call_operand.vmem [shape: f32[128,64], index: 2, kind: input, shape index: {}]
  %s3 = inlined_call_operand.vmem [shape: f32[64,11], index: 3, kind: input, shape index: {}]
  %s4 = inlined_call_operand.vmem [shape: f32[1,128], index: 4, kind: input, shape index: {}]
  %s5 = inlined_call_operand.vmem [shape: f32[1,64], index: 5, kind: input, shape index: {}]
  %s6 = inlined_call_operand.vmem [shape: f32[1,11], index: 6, kind: input, shape index: {}]
  %s7 = inlined_call_operand.vmem [shape: f32[37,11], index: 7, kind: output, shape index: {}]
  %s8 = sld [smem:[#allocation0]]
  $region38: #{multilabel_mlp_forward.1} parent=0
    _
  %s10 = ssub.s32 1, %s8
  %s11 = scalar_select 0, %s10, %s8
  // Predicated region
  $region2: #{multilabel_mlp_forward.1} parent=0 // pred_check
    _
  $region3: #{multilabel_mlp_forward.1} parent=0 // pred_check_branch
    %13 = sbr.rel (0) target = $region5
  $region4: #{multilabel_mlp_forward.1} parent=0 // pred_region
    _
  $region5: #{multilabel_mlp_forward.1} parent=0 // pred_fallthru
    _
  // Predicated region
  $region6: #{multilabel_mlp_forward.1} parent=0 // pred_check
    _
  $region7: #{multilabel_mlp_forward.1} parent=0 // pred_check_branch
    %15 = sbr.rel (0) target = $region9
  $region8: #{multilabel_mlp_forward.1} parent=0 // pred_region
    _
  $region9: #{multilabel_mlp_forward.1} parent=0 // pred_fallthru
    _
  // Predicated region
  $region10: #{multilabel_mlp_forward.1} parent=0 // pred_check
    _
  $region11: #{multilabel_mlp_forward.1} parent=0 // pred_check_branch
    %17 = sbr.rel (0) target = $region13
  $region12: #{multilabel_mlp_forward.1} parent=0 // pred_region
    _
  $region13: #{multilabel_mlp_forward.1} parent=0 // pred_fallthru
    _
  // Predicated region
  $region14: #{multilabel_mlp_forward.1} parent=0 // pred_check
    _
  $region15: #{multilabel_mlp_forward.1} parent=0 // pred_check_branch
    %19 = sbr.rel (0) target = $region17
  $region16: #{multilabel_mlp_forward.1} parent=0 // pred_region
    _
  $region17: #{multilabel_mlp_forward.1} parent=0 // pred_fallthru
    _
  // Predicated region
  $region18: #{multilabel_mlp_forward.1} parent=0 // pred_check
    _
  $region19: #{multilabel_mlp_forward.1} parent=0 // pred_check_branch
    %21 = sbr.rel (0) target = $region21
  $region20: #{multilabel_mlp_forward.1} parent=0 // pred_region
    _
  $region21: #{multilabel_mlp_forward.1} parent=0 // pred_fallthru
    _
  // Predicated region
  $region22: #{multilabel_mlp_forward.1} parent=0 // pred_check
    _
  $region23: #{multilabel_mlp_forward.1} parent=0 // pred_check_branch
    %23 = sbr.rel (0) target = $region25
  $region24: #{multilabel_mlp_forward.1} parent=0 // pred_region
    _
  $region25: #{multilabel_mlp_forward.1} parent=0 // pred_fallthru
    _
  // Predicated region
  $region26: #{multilabel_mlp_forward.1} parent=0 // pred_check
    _
  $region27: #{multilabel_mlp_forward.1} parent=0 // pred_check_branch
    %25 = sbr.rel (0) target = $region29
  $region28: #{multilabel_mlp_forward.1} parent=0 // pred_region
    _
  $region29: #{multilabel_mlp_forward.1} parent=0 // pred_fallthru
    _
  %v26 = vld [vmem:[%s1] sm:$0xff]
  %v27 = vld [vmem:[%s1 + $0x8] sm:$0xff]
  %v28 = vld [vmem:[%s1 + $0x10] sm:$0xff]
  %v29 = vld [vmem:[%s1 + $0x18] sm:$0xff]
  %v30 = vld [vmem:[%s1 + $0x20] sm:$0xff]
  %v31 = vld [vmem:[%s1 + $0x28] sm:$0xff]
  %v32 = vld [vmem:[%s1 + $0x30] sm:$0xff]
  %v33 = vld [vmem:[%s1 + $0x38] sm:$0xff]
  %v34 = vld [vmem:[%s1 + $0x40] sm:$0xff]
  %v35 = vld [vmem:[%s1 + $0x48] sm:$0xff]
  %v36 = vld [vmem:[%s1 + $0x50] sm:$0xff]
  %v37 = vld [vmem:[%s1 + $0x58] sm:$0xff]
  %v38 = vld [vmem:[%s1 + $0x60] sm:$0xff]
  %v39 = vld [vmem:[%s1 + $0x68] sm:$0xff]
  %v40 = vld [vmem:[%s1 + $0x70] sm:$0xff]
  %v41 = vld [vmem:[%s1 + $0x78] sm:$0xff]
  %v42 = vld [vmem:[%s2] sm:$0xff]
  %v43 = vld [vmem:[%s2 + $0x8] sm:$0xff]
  %v44 = vld [vmem:[%s2 + $0x10] sm:$0xff]
  %v45 = vld [vmem:[%s2 + $0x18] sm:$0xff]
  %v46 = vld [vmem:[%s2 + $0x20] sm:$0xff]
  %v47 = vld [vmem:[%s2 + $0x28] sm:$0xff]
  %v48 = vld [vmem:[%s2 + $0x30] sm:$0xff]
  %v49 = vld [vmem:[%s2 + $0x38] sm:$0xff]
  %v50 = vld [vmem:[%s2 + $0x40] sm:$0xff]
  %v51 = vld [vmem:[%s2 + $0x48] sm:$0xff]
  %v52 = vld [vmem:[%s2 + $0x50] sm:$0xff]
  %v53 = vld [vmem:[%s2 + $0x58] sm:$0xff]
  %v54 = vld [vmem:[%s2 + $0x60] sm:$0xff]
  %v55 = vld [vmem:[%s2 + $0x68] sm:$0xff]
  %v56 = vld [vmem:[%s2 + $0x70] sm:$0xff]
  %v57 = vld [vmem:[%s2 + $0x78] sm:$0xff]
  %v58 = vld [vmem:[%s3] sm:$0xff]
  %v59 = vld [vmem:[%s3 + $0x8] sm:$0xff]
  %v60 = vld [vmem:[%s3 + $0x10] sm:$0xff]
  %v61 = vld [vmem:[%s3 + $0x18] sm:$0xff]
  %v62 = vld [vmem:[%s3 + $0x20] sm:$0xff]
  %v63 = vld [vmem:[%s3 + $0x28] sm:$0xff]
  %v64 = vld [vmem:[%s3 + $0x30] sm:$0xff]
  %v65 = vld [vmem:[%s3 + $0x38] sm:$0xff]
  %v66 = vld [vmem:[%s4] sm:$0x1]
  %v67 = vld [vmem:[%s5] sm:$0x1]
  %v68 = vld [vmem:[%s6] sm:$0x1]
  %v69 = vld [vmem:[%s0] sm:$0xff]
  %v70 = vld [vmem:[%s0 + $0x8] sm:$0xff]
  %v71 = vld [vmem:[%s0 + $0x10] sm:$0xff]
  %v72 = vld [vmem:[%s0 + $0x18] sm:$0xff]
  %v73 = vld [vmem:[%s0 + $0x20] sm:$0xff]
  %v75 = vlaneseq
  %v76 = vshrl.u32 %v75, 7
  %v77 = vsub.s32 0, %v76
  %v78 = vrot.slane %v66, %v77
  %80 = vmatprep.subr.mxu0 0.0
  %81 = vmatpush1.msra.mxu0 %v26
  %82 = vmatprep.subr.mxu0 0.0
  %83 = vmatpush1.msra.mxu0 %v27
  %84 = vmatprep.subr.mxu0 0.0
  %85 = vmatpush1.msra.mxu0 %v28
  %86 = vmatprep.subr.mxu0 0.0
  %87 = vmatpush1.msra.mxu0 %v29
  %88 = vmatprep.subr.mxu0 0.0
  %89 = vmatpush1.msra.mxu0 %v30
  %90 = vmatprep.subr.mxu0 0.0
  %91 = vmatpush1.msra.mxu0 %v31
  %92 = vmatprep.subr.mxu0 0.0
  %93 = vmatpush1.msra.mxu0 %v32
  %94 = vmatprep.subr.mxu0 0.0
  %95 = vmatpush1.msra.mxu0 %v33
  %96 = vmatprep.subr.mxu0 0.0
  %97 = vmatpush1.msra.mxu0 %v34
  %98 = vmatprep.subr.mxu0 0.0
  %99 = vmatpush1.msra.mxu0 %v35
  %100 = vmatprep.subr.mxu0 0.0
  %101 = vmatpush1.msra.mxu0 %v36
  %102 = vmatprep.subr.mxu0 0.0
  %103 = vmatpush1.msra.mxu0 %v37
  %104 = vmatprep.subr.mxu0 0.0
  %105 = vmatpush1.msra.mxu0 %v38
  %106 = vmatprep.subr.mxu0 0.0
  %107 = vmatpush1.msra.mxu0 %v39
  %108 = vmatprep.subr.mxu0 0.0
  %109 = vmatpush1.msra.mxu0 %v40
  %110 = vmatprep.subr.mxu0 0.0
  %111 = vmatpush1.msra.mxu0 %v41
  %112 = vmatprep.subr.mxu0 0.0
  %113 = vmatpush1.msra.mxu0 0.0
  %114 = vmatprep.subr.mxu0 0.0
  %115 = vmatpush1.msra.mxu0 0.0
  %116 = vmatprep.subr.mxu0 0.0
  %117 = vmatpush1.msra.mxu0 0.0
  %118 = vmatprep.subr.mxu0 0.0
  %119 = vmatpush1.msra.mxu0 0.0
  %120 = vmatprep.subr.mxu0 0.0
  %121 = vmatpush1.msra.mxu0 0.0
  %122 = vmatprep.subr.mxu0 0.0
  %123 = vmatpush1.msra.mxu0 0.0
  %124 = vmatprep.subr.mxu0 0.0
  %125 = vmatpush1.msra.mxu0 0.0
  %126 = vmatprep.subr.mxu0 0.0
  %127 = vmatpush1.msra.mxu0 0.0
  %128 = vmatprep.subr.mxu0 0.0
  %129 = vmatpush1.msra.mxu0 0.0
  %130 = vmatprep.subr.mxu0 0.0
  %131 = vmatpush1.msra.mxu0 0.0
  %132 = vmatprep.subr.mxu0 0.0
  %133 = vmatpush1.msra.mxu0 0.0
  %134 = vmatprep.subr.mxu0 0.0
  %135 = vmatpush1.msra.mxu0 0.0
  %136 = vmatprep.subr.mxu0 0.0
  %137 = vmatpush1.msra.mxu0 0.0
  %138 = vmatprep.subr.mxu0 0.0
  %139 = vmatpush1.msra.mxu0 0.0
  %140 = vmatprep.subr.mxu0 0.0
  %141 = vmatpush1.msra.mxu0 0.0
  %142 = vmatprep.subr.mxu0 0.0
  %143 = vmatpush1.msra.mxu0 0.0
  %144 = vmatprep.mubr.f32.mxu0 0.0
  %145 = vmatmul.mubr.f32.gmra.mrb[0].mxu0 %v69
  %v146 = vpop.f32.mrb[0].mxu0
  %v147 = vadd.f32 %v78, %v146
  %v148 = vpop.f32.mrb[0].mxu0
  %149 = vmatprep.mubr.f32.mxu0 0.0
  %150 = vmatmul.mubr.f32.gmra.mrb[0].mxu0 %v70
  %v151 = vpop.f32.mrb[0].mxu0
  %v152 = vadd.f32 %v78, %v151
  %v153 = vpop.f32.mrb[0].mxu0
  %154 = vmatprep.mubr.f32.mxu0 0.0
  %155 = vmatmul.mubr.f32.gmra.mrb[0].mxu0 %v71
  %v156 = vpop.f32.mrb[0].mxu0
  %v157 = vadd.f32 %v78, %v156
  %v158 = vpop.f32.mrb[0].mxu0
  %159 = vmatprep.mubr.f32.mxu0 0.0
  %160 = vmatmul.mubr.f32.gmra.mrb[0].mxu0 %v72
  %v161 = vpop.f32.mrb[0].mxu0
  %v162 = vadd.f32 %v78, %v161
  %v163 = vpop.f32.mrb[0].mxu0
  %164 = vmatprep.mubr.f32.mxu0 0.0
  %165 = vmatmul.mubr.f32.gmra.mrb[0].mxu0 %v73
  %v166 = vpop.f32.mrb[0].mxu0
  %v167 = vadd.f32 %v78, %v166
  %v168 = vpop.f32.mrb[0].mxu0
  %169 = vdwg.mxu0
  %v170 = vmax.f32 %v147, 0.0
  %v171 = vmax.f32 %v152, 0.0
  %v172 = vmax.f32 %v157, 0.0
  %v173 = vmax.f32 %v162, 0.0
  %v174 = vmax.f32 %v167, 0.0
  %v176 = vlaneseq
  %v177 = vshrl.u32 %v176, 7
  %v178 = vsub.s32 0, %v177
  %v179 = vrot.slane %v67, %v178
  %181 = vmatprep.subr.mxu0 0.0
  %182 = vmatpush1.msra.mxu0 %v42
  %183 = vmatprep.subr.mxu0 0.0
  %184 = vmatpush1.msra.mxu0 %v43
  %185 = vmatprep.subr.mxu0 0.0
  %186 = vmatpush1.msra.mxu0 %v44
  %187 = vmatprep.subr.mxu0 0.0
  %188 = vmatpush1.msra.mxu0 %v45
  %189 = vmatprep.subr.mxu0 0.0
  %190 = vmatpush1.msra.mxu0 %v46
  %191 = vmatprep.subr.mxu0 0.0
  %192 = vmatpush1.msra.mxu0 %v47
  %193 = vmatprep.subr.mxu0 0.0
  %194 = vmatpush1.msra.mxu0 %v48
  %195 = vmatprep.subr.mxu0 0.0
  %196 = vmatpush1.msra.mxu0 %v49
  %197 = vmatprep.subr.mxu0 0.0
  %198 = vmatpush1.msra.mxu0 %v50
  %199 = vmatprep.subr.mxu0 0.0
  %200 = vmatpush1.msra.mxu0 %v51
  %201 = vmatprep.subr.mxu0 0.0
  %202 = vmatpush1.msra.mxu0 %v52
  %203 = vmatprep.subr.mxu0 0.0
  %204 = vmatpush1.msra.mxu0 %v53
  %205 = vmatprep.subr.mxu0 0.0
  %206 = vmatpush1.msra.mxu0 %v54
  %207 = vmatprep.subr.mxu0 0.0
  %208 = vmatpush1.msra.mxu0 %v55
  %209 = vmatprep.subr.mxu0 0.0
  %210 = vmatpush1.msra.mxu0 %v56
  %211 = vmatprep.subr.mxu0 0.0
  %212 = vmatpush1.msra.mxu0 %v57
  %213 = vmatprep.subr.mxu0 0.0
  %214 = vmatpush1.msra.mxu0 0.0
  %215 = vmatprep.subr.mxu0 0.0
  %216 = vmatpush1.msra.mxu0 0.0
  %217 = vmatprep.subr.mxu0 0.0
  %218 = vmatpush1.msra.mxu0 0.0
  %219 = vmatprep.subr.mxu0 0.0
  %220 = vmatpush1.msra.mxu0 0.0
  %221 = vmatprep.subr.mxu0 0.0
  %222 = vmatpush1.msra.mxu0 0.0
  %223 = vmatprep.subr.mxu0 0.0
  %224 = vmatpush1.msra.mxu0 0.0
  %225 = vmatprep.subr.mxu0 0.0
  %226 = vmatpush1.msra.mxu0 0.0
  %227 = vmatprep.subr.mxu0 0.0
  %228 = vmatpush1.msra.mxu0 0.0
  %229 = vmatprep.subr.mxu0 0.0
  %230 = vmatpush1.msra.mxu0 0.0
  %231 = vmatprep.subr.mxu0 0.0
  %232 = vmatpush1.msra.mxu0 0.0
  %233 = vmatprep.subr.mxu0 0.0
  %234 = vmatpush1.msra.mxu0 0.0
  %235 = vmatprep.subr.mxu0 0.0
  %236 = vmatpush1.msra.mxu0 0.0
  %237 = vmatprep.subr.mxu0 0.0
  %238 = vmatpush1.msra.mxu0 0.0
  %239 = vmatprep.subr.mxu0 0.0
  %240 = vmatpush1.msra.mxu0 0.0
  %241 = vmatprep.subr.mxu0 0.0
  %242 = vmatpush1.msra.mxu0 0.0
  %243 = vmatprep.subr.mxu0 0.0
  %244 = vmatpush1.msra.mxu0 0.0
  %245 = vmatprep.mubr.f32.mxu0 0.0
  %246 = vmatmul.mubr.f32.gmra.mrb[0].mxu0 %v170
  %v247 = vpop.f32.mrb[0].mxu0
  %v248 = vadd.f32 %v179, %v247
  %v249 = vpop.f32.mrb[0].mxu0
  %250 = vmatprep.mubr.f32.mxu0 0.0
  %251 = vmatmul.mubr.f32.gmra.mrb[0].mxu0 %v171
  %v252 = vpop.f32.mrb[0].mxu0
  %v253 = vadd.f32 %v179, %v252
  %v254 = vpop.f32.mrb[0].mxu0
  %255 = vmatprep.mubr.f32.mxu0 0.0
  %256 = vmatmul.mubr.f32.gmra.mrb[0].mxu0 %v172
  %v257 = vpop.f32.mrb[0].mxu0
  %v258 = vadd.f32 %v179, %v257
  %v259 = vpop.f32.mrb[0].mxu0
  %260 = vmatprep.mubr.f32.mxu0 0.0
  %261 = vmatmul.mubr.f32.gmra.mrb[0].mxu0 %v173
  %v262 = vpop.f32.mrb[0].mxu0
  %v263 = vadd.f32 %v179, %v262
  %v264 = vpop.f32.mrb[0].mxu0
  %265 = vmatprep.mubr.f32.mxu0 0.0
  %266 = vmatmul.mubr.f32.gmra.mrb[0].mxu0 %v174
  %v267 = vpop.f32.mrb[0].mxu0
  %v268 = vadd.f32 %v179, %v267
  %v269 = vpop.f32.mrb[0].mxu0
  %270 = vdwg.mxu0
  %v271 = vmax.f32 %v248, 0.0
  %v272 = vmax.f32 %v253, 0.0
  %v273 = vmax.f32 %v258, 0.0
  %v274 = vmax.f32 %v263, 0.0
  %v275 = vmax.f32 %v268, 0.0
  %v277 = vlaneseq
  %v278 = vshrl.u32 %v277, 7
  %v279 = vsub.s32 0, %v278
  %v280 = vrot.slane %v68, %v279
  %vm282 = vcmask 523264
  %v284 = vsel %vm282, %v271, 0
  %v287 = vsel %vm282, %v272, 0
  %v290 = vsel %vm282, %v273, 0
  %v293 = vsel %vm282, %v274, 0
  %v296 = vsel %vm282, %v275, 0
  %298 = vmatprep.subr.mxu0 0.0
  %299 = vmatpush1.msra.mxu0 %v58
  %300 = vmatprep.subr.mxu0 0.0
  %301 = vmatpush1.msra.mxu0 %v59
  %302 = vmatprep.subr.mxu0 0.0
  %303 = vmatpush1.msra.mxu0 %v60
  %304 = vmatprep.subr.mxu0 0.0
  %305 = vmatpush1.msra.mxu0 %v61
  %306 = vmatprep.subr.mxu0 0.0
  %307 = vmatpush1.msra.mxu0 %v62
  %308 = vmatprep.subr.mxu0 0.0
  %309 = vmatpush1.msra.mxu0 %v63
  %310 = vmatprep.subr.mxu0 0.0
  %311 = vmatpush1.msra.mxu0 %v64
  %312 = vmatprep.subr.mxu0 0.0
  %313 = vmatpush1.msra.mxu0 %v65
  %314 = vmatprep.subr.mxu0 0.0
  %315 = vmatpush1.msra.mxu0 0.0
  %316 = vmatprep.subr.mxu0 0.0
  %317 = vmatpush1.msra.mxu0 0.0
  %318 = vmatprep.subr.mxu0 0.0
  %319 = vmatpush1.msra.mxu0 0.0
  %320 = vmatprep.subr.mxu0 0.0
  %321 = vmatpush1.msra.mxu0 0.0
  %322 = vmatprep.subr.mxu0 0.0
  %323 = vmatpush1.msra.mxu0 0.0
  %324 = vmatprep.subr.mxu0 0.0
  %325 = vmatpush1.msra.mxu0 0.0
  %326 = vmatprep.subr.mxu0 0.0
  %327 = vmatpush1.msra.mxu0 0.0
  %328 = vmatprep.subr.mxu0 0.0
  %329 = vmatpush1.msra.mxu0 0.0
  %330 = vmatprep.subr.mxu0 0.0
  %331 = vmatpush1.msra.mxu0 0.0
  %332 = vmatprep.subr.mxu0 0.0
  %333 = vmatpush1.msra.mxu0 0.0
  %334 = vmatprep.subr.mxu0 0.0
  %335 = vmatpush1.msra.mxu0 0.0
  %336 = vmatprep.subr.mxu0 0.0
  %337 = vmatpush1.msra.mxu0 0.0
  %338 = vmatprep.subr.mxu0 0.0
  %339 = vmatpush1.msra.mxu0 0.0
  %340 = vmatprep.subr.mxu0 0.0
  %341 = vmatpush1.msra.mxu0 0.0
  %342 = vmatprep.subr.mxu0 0.0
  %343 = vmatpush1.msra.mxu0 0.0
  %344 = vmatprep.subr.mxu0 0.0
  %345 = vmatpush1.msra.mxu0 0.0
  %346 = vmatprep.subr.mxu0 0.0
  %347 = vmatpush1.msra.mxu0 0.0
  %348 = vmatprep.subr.mxu0 0.0
  %349 = vmatpush1.msra.mxu0 0.0
  %350 = vmatprep.subr.mxu0 0.0
  %351 = vmatpush1.msra.mxu0 0.0
  %352 = vmatprep.subr.mxu0 0.0
  %353 = vmatpush1.msra.mxu0 0.0
  %354 = vmatprep.subr.mxu0 0.0
  %355 = vmatpush1.msra.mxu0 0.0
  %356 = vmatprep.subr.mxu0 0.0
  %357 = vmatpush1.msra.mxu0 0.0
  %358 = vmatprep.subr.mxu0 0.0
  %359 = vmatpush1.msra.mxu0 0.0
  %360 = vmatprep.subr.mxu0 0.0
  %361 = vmatpush1.msra.mxu0 0.0
  %362 = vmatprep.mubr.f32.mxu0 0.0
  %363 = vmatmul.mubr.f32.gmra.mrb[0].mxu0 %v284
  %v364 = vpop.f32.mrb[0].mxu0
  %v365 = vadd.f32 %v280, %v364
  %v366 = vpop.f32.mrb[0].mxu0
  %367 = vmatprep.mubr.f32.mxu0 0.0
  %368 = vmatmul.mubr.f32.gmra.mrb[0].mxu0 %v287
  %v369 = vpop.f32.mrb[0].mxu0
  %v370 = vadd.f32 %v280, %v369
  %v371 = vpop.f32.mrb[0].mxu0
  %372 = vmatprep.mubr.f32.mxu0 0.0
  %373 = vmatmul.mubr.f32.gmra.mrb[0].mxu0 %v290
  %v374 = vpop.f32.mrb[0].mxu0
  %v375 = vadd.f32 %v280, %v374
  %v376 = vpop.f32.mrb[0].mxu0
  %377 = vmatprep.mubr.f32.mxu0 0.0
  %378 = vmatmul.mubr.f32.gmra.mrb[0].mxu0 %v293
  %v379 = vpop.f32.mrb[0].mxu0
  %v380 = vadd.f32 %v280, %v379
  %v381 = vpop.f32.mrb[0].mxu0
  %382 = vmatprep.mubr.f32.mxu0 0.0
  %383 = vmatmul.mubr.f32.gmra.mrb[0].mxu0 %v296
  %v384 = vpop.f32.mrb[0].mxu0
  %v385 = vadd.f32 %v280, %v384
  %v386 = vpop.f32.mrb[0].mxu0
  %387 = vdwg.mxu0
  %vm388 = vcmask 89088
  %389 = vst.msk [vmem:[%s7] sm:$0xff] %vm388, %v365
  %390 = vst.msk [vmem:[%s7 + $0x8] sm:$0xff] %vm388, %v370
  %391 = vst.msk [vmem:[%s7 + $0x10] sm:$0xff] %vm388, %v375
  %392 = vst.msk [vmem:[%s7 + $0x18] sm:$0xff] %vm388, %v380
  %393 = vst.msk [vmem:[%s7 + $0x20] sm:$0xff] %vm388, %v385
  // Predicated region
  $region30: #{multilabel_mlp_forward.1} parent=0 // pred_check
    _
  $region31: #{multilabel_mlp_forward.1} parent=0 // pred_check_branch
    %395 = sbr.rel (0) target = $region33
  $region32: #{multilabel_mlp_forward.1} parent=0 // pred_region
    _
  $region33: #{multilabel_mlp_forward.1} parent=0 // pred_fallthru
    _
  // Predicated region
  $region34: #{multilabel_mlp_forward.1} parent=0 // pred_check
    _
  $region35: #{multilabel_mlp_forward.1} parent=0 // pred_check_branch
    %397 = sbr.rel (0) target = $region37
  $region36: #{multilabel_mlp_forward.1} parent=0 // pred_region
    _
  $region37: #{multilabel_mlp_forward.1} parent=0 // pred_fallthru
    _

</llo_original>
